<compile_context>
chip_gen: v6e
topology: v6e:2x2x1
jax: 0.10.0
libtpu: 0.0.40
codegen_flags: <defaults>
</compile_context>

<pallas_src>
import math

import jax
import jax.numpy as jnp
from jax.experimental import pallas as pl
from jax.experimental.pallas import tpu as pltpu

_SUBLANES = 8
_LANE_QUANTUM = 128


def _fused_sum_scale_kernel(scale_ref, sub_ref, out_ref):
    """scale_ref: SMEM (L,) f32; sub_ref: VMEM (L, K_max, 8, LANES) f32;
    out_ref: VMEM (L, 8, LANES) f32.

    Single invocation (no grid): for each level l,
        out[l] = scale[l] * sum_k sub[l, k]
    L and K_max are tiny compile-time constants -> unrolled VPU adds.
    """
    n_levels = sub_ref.shape[0]
    k_max = sub_ref.shape[1]
    for l in range(n_levels):
        acc = sub_ref[l, 0]
        for k in range(1, k_max):
            acc = acc + sub_ref[l, k]
        out_ref[l] = acc * scale_ref[l]


def build_features_fused(sub_features_per_level, levels):
    """Fused hot path for every level in one Pallas launch.

    sub_features_per_level: list of float32 arrays, level i has shape
        (K_i, B, C_i, H, W).
    levels: list of python floats, one scale per level.
    Returns: list of float32 arrays, level i has shape (B, C_i, H, W),
        equal to levels[i] * sum_k sub_features_per_level[i][k].
    """
    n_levels = len(sub_features_per_level)
    assert n_levels == len(levels)

    shapes = [tuple(s.shape) for s in sub_features_per_level]
    totals = [math.prod(sh[1:]) for sh in shapes]
    k_max = max(sh[0] for sh in shapes)

    # Common lane-dense layout: 8 sublanes x lane_max lanes (multiple of 128).
    lane_max = max(
        -(-t // (_SUBLANES * _LANE_QUANTUM)) * _LANE_QUANTUM for t in totals
    )
    e_max = _SUBLANES * lane_max

    padded = []
    for s, t in zip(sub_features_per_level, totals):
        k_i = s.shape[0]
        flat = s.reshape(k_i, t).astype(jnp.float32)
        flat = jnp.pad(flat, ((0, k_max - k_i), (0, e_max - t)))
        padded.append(flat.reshape(k_max, _SUBLANES, lane_max))
    stacked = jnp.stack(padded, axis=0)  # (L, K_max, 8, lane_max)
    scales = jnp.asarray(levels, dtype=jnp.float32)  # (L,)

    out = pl.pallas_call(
        _fused_sum_scale_kernel,
        out_shape=jax.ShapeDtypeStruct((n_levels, _SUBLANES, lane_max), jnp.float32),
        in_specs=[
            pl.BlockSpec(memory_space=pltpu.MemorySpace.SMEM),  # scales
            pl.BlockSpec(memory_space=pltpu.MemorySpace.VMEM),  # stacked subs
        ],
        out_specs=pl.BlockSpec(memory_space=pltpu.MemorySpace.VMEM),
    )(scales, stacked)

    feats = []
    for i, (sh, t) in enumerate(zip(shapes, totals)):
        feats.append(out[i].reshape(-1)[:t].reshape(sh[1:]))
    return feats


class HeadConfig:
    def __init__(self, loss_type, last_channel, feature_list, levels):
        self.loss_type = loss_type
        self.last_channel = last_channel
        self.feature_list = feature_list
        self.levels = levels


class FeatureGeneratorNotrain:
    """JAX/Pallas port of the PyTorch FeatureGeneratorNotrain."""

    def __init__(self, head_config, key):
        self.loss_type = head_config.loss_type
        self.last_channel = head_config.last_channel
        self.feature_list = head_config.feature_list
        self.width = 8
        self.height = 8
        self.batch_size = 16
        self.level = head_config.levels

        # TODO(synk): original code loads sub-features from ./data/features/*.pth;
        # here they are synthesized deterministically from the PRNG key instead.
        subs_per_level = []
        for i, lc in enumerate(self.last_channel):
            feat_list = self.feature_list[i]
            subs = []
            for j, _feat in enumerate(feat_list):
                sub_key = jax.random.fold_in(jax.random.fold_in(key, i), j)
                sub = jax.random.normal(
                    sub_key,
                    (self.batch_size, lc, self.width, self.height),
                    dtype=jnp.float32,
                )
                subs.append(sub)
            subs_per_level.append(jnp.stack(subs, axis=0))  # (K_i, B, C_i, H, W)

        if isinstance(self.level, list):
            levels = [float(v) for v in self.level]
        else:
            levels = [float(self.level)] * len(self.last_channel)

        # One fused Pallas launch computes every level's sum + scale.
        self.features = build_features_fused(subs_per_level, levels)

    def forward(self, x):
        # Matches PyTorch: ignores x, returns the list of frozen features.
        xs = []
        for f in self.features:
            xs.append(f)
        return xs

    __call__ = forward


if __name__ == "__main__":
    key = jax.random.PRNGKey(0)

    head_config = HeadConfig(
        loss_type="mse",
        last_channel=[4, 8],
        feature_list=[["feat_a", "feat_b"], ["feat_c", "feat_d", "feat_e"]],
        levels=[0.5, 2.0],
    )

    gen = FeatureGeneratorNotrain(head_config, key)

    # Dummy input (ignored by forward, as in the PyTorch module).
    x = jax.random.normal(jax.random.PRNGKey(1), (2, 4, 16, 16), dtype=jnp.float32)

    outs = gen(x)
    outs = [jax.block_until_ready(o) for o in outs]

    # Verify against a plain-JAX reference of the same construction.
    ok = True
    for i, lc in enumerate(head_config.last_channel):
        subs = []
        for j, _feat in enumerate(head_config.feature_list[i]):
            sub_key = jax.random.fold_in(jax.random.fold_in(key, i), j)
            subs.append(
                jax.random.normal(sub_key, (16, lc, 8, 8), dtype=jnp.float32)
            )
        ref = sum(subs) * head_config.levels[i]
        if outs[i].shape != (16, lc, 8, 8):
            ok = False
        if not jnp.allclose(outs[i], ref, atol=1e-5, rtol=1e-5):
            ok = False

    if ok:
        print("KERNEL_OK")
    else:
        print("KERNEL_MISMATCH")
</pallas_src>

<mosaic_0001>
module attributes {stable_mosaic.version = 11 : i64} {
  func.func @_fused_sum_scale_kernel(%arg0: memref<2xf32, #tpu.memory_space<smem>>, %arg1: memref<2x3x8x1024xf32, #tpu.memory_space<vmem>>, %arg2: memref<2x8x1024xf32, #tpu.memory_space<vmem>>) attributes {dimension_semantics = [], scalar_prefetch = 0 : i64, scratch_operands = 0 : i64, tpu.core_type = #tpu.core_type<tc>} {
    %c0 = arith.constant 0 : index
    %c0_0 = arith.constant 0 : index
    %c0_1 = arith.constant 0 : index
    %c0_2 = arith.constant 0 : index
    %0 = vector.load %arg1[%c0, %c0_0, %c0_1, %c0_2] : memref<2x3x8x1024xf32, #tpu.memory_space<vmem>>, vector<1x1x8x1024xf32>
    %1 = vector.shape_cast %0 : vector<1x1x8x1024xf32> to vector<8x1024xf32>
    %c0_3 = arith.constant 0 : index
    %c1 = arith.constant 1 : index
    %c0_4 = arith.constant 0 : index
    %c0_5 = arith.constant 0 : index
    %2 = vector.load %arg1[%c0_3, %c1, %c0_4, %c0_5] : memref<2x3x8x1024xf32, #tpu.memory_space<vmem>>, vector<1x1x8x1024xf32>
    %3 = vector.shape_cast %2 : vector<1x1x8x1024xf32> to vector<8x1024xf32>
    %4 = arith.addf %1, %3 : vector<8x1024xf32>
    %c0_6 = arith.constant 0 : index
    %c2 = arith.constant 2 : index
    %c0_7 = arith.constant 0 : index
    %c0_8 = arith.constant 0 : index
    %5 = vector.load %arg1[%c0_6, %c2, %c0_7, %c0_8] : memref<2x3x8x1024xf32, #tpu.memory_space<vmem>>, vector<1x1x8x1024xf32>
    %6 = vector.shape_cast %5 : vector<1x1x8x1024xf32> to vector<8x1024xf32>
    %7 = arith.addf %4, %6 : vector<8x1024xf32>
    %c0_9 = arith.constant 0 : index
    %8 = memref.load %arg0[%c0_9] : memref<2xf32, #tpu.memory_space<smem>>
    %9 = vector.broadcast %8 : f32 to vector<8x1024xf32>
    %10 = arith.mulf %7, %9 : vector<8x1024xf32>
    %c0_10 = arith.constant 0 : index
    %c0_11 = arith.constant 0 : index
    %c0_12 = arith.constant 0 : index
    %11 = vector.load %arg2[%c0_10, %c0_11, %c0_12] : memref<2x8x1024xf32, #tpu.memory_space<vmem>>, vector<1x8x1024xf32>
    %12 = vector.shape_cast %11 : vector<1x8x1024xf32> to vector<8x1024xf32>
    %13 = vector.shape_cast %10 : vector<8x1024xf32> to vector<1x8x1024xf32>
    tpu.vector_store %arg2[%c0_10, %c0_11, %c0_12], %13 {strides = array<i32>} : memref<2x8x1024xf32, #tpu.memory_space<vmem>>, vector<1x8x1024xf32>,
    %c1_13 = arith.constant 1 : index
    %c0_14 = arith.constant 0 : index
    %c0_15 = arith.constant 0 : index
    %c0_16 = arith.constant 0 : index
    %14 = vector.load %arg1[%c1_13, %c0_14, %c0_15, %c0_16] : memref<2x3x8x1024xf32, #tpu.memory_space<vmem>>, vector<1x1x8x1024xf32>
    %15 = vector.shape_cast %14 : vector<1x1x8x1024xf32> to vector<8x1024xf32>
    %c1_17 = arith.constant 1 : index
    %c1_18 = arith.constant 1 : index
    %c0_19 = arith.constant 0 : index
    %c0_20 = arith.constant 0 : index
    %16 = vector.load %arg1[%c1_17, %c1_18, %c0_19, %c0_20] : memref<2x3x8x1024xf32, #tpu.memory_space<vmem>>, vector<1x1x8x1024xf32>
    %17 = vector.shape_cast %16 : vector<1x1x8x1024xf32> to vector<8x1024xf32>
    %18 = arith.addf %15, %17 : vector<8x1024xf32>
    %c1_21 = arith.constant 1 : index
    %c2_22 = arith.constant 2 : index
    %c0_23 = arith.constant 0 : index
    %c0_24 = arith.constant 0 : index
    %19 = vector.load %arg1[%c1_21, %c2_22, %c0_23, %c0_24] : memref<2x3x8x1024xf32, #tpu.memory_space<vmem>>, vector<1x1x8x1024xf32>
    %20 = vector.shape_cast %19 : vector<1x1x8x1024xf32> to vector<8x1024xf32>
    %21 = arith.addf %18, %20 : vector<8x1024xf32>
    %c1_25 = arith.constant 1 : index
    %22 = memref.load %arg0[%c1_25] : memref<2xf32, #tpu.memory_space<smem>>
    %23 = vector.broadcast %22 : f32 to vector<8x1024xf32>
    %24 = arith.mulf %21, %23 : vector<8x1024xf32>
    %c1_26 = arith.constant 1 : index
    %c0_27 = arith.constant 0 : index
    %c0_28 = arith.constant 0 : index
    %25 = vector.load %arg2[%c1_26, %c0_27, %c0_28] : memref<2x8x1024xf32, #tpu.memory_space<vmem>>, vector<1x8x1024xf32>
    %26 = vector.shape_cast %25 : vector<1x8x1024xf32> to vector<8x1024xf32>
    %27 = vector.shape_cast %24 : vector<8x1024xf32> to vector<1x8x1024xf32>
    tpu.vector_store %arg2[%c1_26, %c0_27, %c0_28], %27 {strides = array<i32>} : memref<2x8x1024xf32, #tpu.memory_space<vmem>>, vector<1x8x1024xf32>,
    return
  }
}

</mosaic_0001>

<llo_original>
// kernel: tpu_custom_call.1
$region0: #{tpu_custom_call.1}
  #allocation0 [shape = 'u32[]', space=smem, size = 0x4, offset = 0x4, fixed_abs, tag = 'smem constant byte address 0x4 - core index']
  #allocation1 [shape = 'u32[144,128]{1,0:T(1,128)}', space=vmem, size = 0x12000, scoped, tag = 'internal scratch']
  %s0 = inlined_call_operand.hbm [shape: f32[2], index: 0, kind: input, shape index: {}]
  %s1 = inlined_call_operand.hbm [shape: f32[2,3,8,1024], index: 1, kind: input, shape index: {}]
  %s2 = inlined_call_operand.hbm [shape: f32[2,8,1024], index: 2, kind: output, shape index: {}]
  %s3 = sld [smem:[#allocation0]]
  $region26: #{tpu_custom_call.1} parent=0
    _
  %s5 = ssub.s32 1, %s3
  %s6 = scalar_select 0, %s5, %s3
  $region1: #{tpu_custom_call.1} parent=0
    #allocation2 [shape = 'u8[512]{0}', space=smem, size = 0x200, scoped, tag = 'input window, operand 0, single buffered']
    #allocation3 [shape = 's32[1]{0}', space=sflag, size = 0x4, scoped, tag = 'scoped memory for tpu_custom_call.1']
    #allocation4 [shape = 's32[1]{0}', space=sflag, size = 0x4, scoped, tag = 'scoped memory for tpu_custom_call.1']
    #allocation5 [shape = 's32[1]{0}', space=sflag, size = 0x4, scoped, tag = 'scoped memory for tpu_custom_call.1']
    #allocation6 [shape = 'u8[196608]{0}', space=vmem, size = 0x30000, scoped, tag = 'input window, operand 1, single buffered']
    #allocation7 [shape = 'u8[65536]{0}', space=vmem, size = 0x10000, scoped, tag = 'output window, operand 0, single buffered']
    %7 = vsyncpa [#allocation5], 0
    %8 = vsyncpa [#allocation3], 0
    %9 = vsyncpa [#allocation4], 0
    // Predicated region
    $region2: #{tpu_custom_call.1} parent=1 // pred_check
      _
    $region3: #{tpu_custom_call.1} parent=1 // pred_check_branch
      %11 = sbr.rel (0) target = $region5
    $region4: #{tpu_custom_call.1} parent=1 // pred_region
      %s13 = ssub.s32 16, 16
      %14 = vsyncadd [#allocation5], %s13
      %17 = dma.hbm_to_smem %s0, 16, [#allocation2], [#allocation5]
    $region5: #{tpu_custom_call.1} parent=1 // pred_fallthru
      _
    // Predicated region
    $region6: #{tpu_custom_call.1} parent=1 // pred_check
      _
    $region7: #{tpu_custom_call.1} parent=1 // pred_check_branch
      %19 = sbr.rel (0) target = $region9
    $region8: #{tpu_custom_call.1} parent=1 // pred_region
      %s21 = ssub.s32 6144, 6144
      %22 = vsyncadd [#allocation3], %s21
      %s23 = sshll.u32 [#allocation6], 4
      %s24 = int_to_ptr.vmem [resolvable:$true] %s23
      %29 = dma.hbm_to_vmem [thread:$0]  %s1, 6144, %s24, [#allocation3], 1024, 1024, 64
    $region9: #{tpu_custom_call.1} parent=1 // pred_fallthru
      _
    // Predicated region
    $region10: #{tpu_custom_call.1} parent=1 // pred_check
      _
    $region11: #{tpu_custom_call.1} parent=1 // pred_check_branch
      %31 = sbr.rel (0) target = $region13
    $region12: #{tpu_custom_call.1} parent=1 // pred_region
      %32 = dma.done [#allocation5], 16
    $region13: #{tpu_custom_call.1} parent=1 // pred_fallthru
      _
    // Predicated region
    $region14: #{tpu_custom_call.1} parent=1 // pred_check
      _
    $region15: #{tpu_custom_call.1} parent=1 // pred_check_branch
      %34 = sbr.rel (0) target = $region17
    $region16: #{tpu_custom_call.1} parent=1 // pred_region
      %35 = dma.done [#allocation3], 6144
    $region17: #{tpu_custom_call.1} parent=1 // pred_fallthru
      _
    %36 = sfence
    %v37 = vld [vmem:[#allocation6] sm:$0xff]
    %v38 = vld [vmem:[#allocation6 + $0x8] sm:$0xff]
    %v39 = vld [vmem:[#allocation6 + $0x10] sm:$0xff]
    %v40 = vld [vmem:[#allocation6 + $0x18] sm:$0xff]
    %v41 = vld [vmem:[#allocation6 + $0x20] sm:$0xff]
    %v42 = vld [vmem:[#allocation6 + $0x28] sm:$0xff]
    %v43 = vld [vmem:[#allocation6 + $0x30] sm:$0xff]
    %v44 = vld [vmem:[#allocation6 + $0x38] sm:$0xff]
    %s45 = scalar_lea.vmem [#allocation6], 64
    %v46 = vld [vmem:[%s45] sm:$0xff]
    %v47 = vld [vmem:[%s45 + $0x8] sm:$0xff]
    %v48 = vld [vmem:[%s45 + $0x10] sm:$0xff]
    %v49 = vld [vmem:[%s45 + $0x18] sm:$0xff]
    %v50 = vld [vmem:[%s45 + $0x20] sm:$0xff]
    %v51 = vld [vmem:[%s45 + $0x28] sm:$0xff]
    %v52 = vld [vmem:[%s45 + $0x30] sm:$0xff]
    %v53 = vld [vmem:[%s45 + $0x38] sm:$0xff]
    %v54 = vadd.f32 %v37, %v46
    %v55 = vadd.f32 %v38, %v47
    %v56 = vadd.f32 %v39, %v48
    %v57 = vadd.f32 %v40, %v49
    %v58 = vadd.f32 %v41, %v50
    %v59 = vadd.f32 %v42, %v51
    %v60 = vadd.f32 %v43, %v52
    %v61 = vadd.f32 %v44, %v53
    %s62 = scalar_lea.vmem [#allocation6], 128
    %v63 = vld [vmem:[%s62] sm:$0xff]
    %v64 = vld [vmem:[%s62 + $0x8] sm:$0xff]
    %v65 = vld [vmem:[%s62 + $0x10] sm:$0xff]
    %v66 = vld [vmem:[%s62 + $0x18] sm:$0xff]
    %v67 = vld [vmem:[%s62 + $0x20] sm:$0xff]
    %v68 = vld [vmem:[%s62 + $0x28] sm:$0xff]
    %v69 = vld [vmem:[%s62 + $0x30] sm:$0xff]
    %v70 = vld [vmem:[%s62 + $0x38] sm:$0xff]
    %v71 = vadd.f32 %v54, %v63
    %v72 = vadd.f32 %v55, %v64
    %v73 = vadd.f32 %v56, %v65
    %v74 = vadd.f32 %v57, %v66
    %v75 = vadd.f32 %v58, %v67
    %v76 = vadd.f32 %v59, %v68
    %v77 = vadd.f32 %v60, %v69
    %v78 = vadd.f32 %v61, %v70
    %s79 = sld [smem:[#allocation2]]
    %v80 = vstv %s79
    %v81 = vmul.f32 %v71, %v80
    %v82 = vmul.f32 %v72, %v80
    %v83 = vmul.f32 %v73, %v80
    %v84 = vmul.f32 %v74, %v80
    %v85 = vmul.f32 %v75, %v80
    %v86 = vmul.f32 %v76, %v80
    %v87 = vmul.f32 %v77, %v80
    %v88 = vmul.f32 %v78, %v80
    %89 = vst [vmem:[#allocation7] sm:$0xff] %v81
    %90 = vst [vmem:[#allocation7 + $0x8] sm:$0xff] %v82
    %91 = vst [vmem:[#allocation7 + $0x10] sm:$0xff] %v83
    %92 = vst [vmem:[#allocation7 + $0x18] sm:$0xff] %v84
    %93 = vst [vmem:[#allocation7 + $0x20] sm:$0xff] %v85
    %94 = vst [vmem:[#allocation7 + $0x28] sm:$0xff] %v86
    %95 = vst [vmem:[#allocation7 + $0x30] sm:$0xff] %v87
    %96 = vst [vmem:[#allocation7 + $0x38] sm:$0xff] %v88
    %s97 = scalar_lea.vmem [#allocation6], 192
    %v98 = vld [vmem:[%s97] sm:$0xff]
    %v99 = vld [vmem:[%s97 + $0x8] sm:$0xff]
    %v100 = vld [vmem:[%s97 + $0x10] sm:$0xff]
    %v101 = vld [vmem:[%s97 + $0x18] sm:$0xff]
    %v102 = vld [vmem:[%s97 + $0x20] sm:$0xff]
    %v103 = vld [vmem:[%s97 + $0x28] sm:$0xff]
    %v104 = vld [vmem:[%s97 + $0x30] sm:$0xff]
    %v105 = vld [vmem:[%s97 + $0x38] sm:$0xff]
    %s106 = scalar_lea.vmem [#allocation6], 256
    %v107 = vld [vmem:[%s106] sm:$0xff]
    %v108 = vld [vmem:[%s106 + $0x8] sm:$0xff]
    %v109 = vld [vmem:[%s106 + $0x10] sm:$0xff]
    %v110 = vld [vmem:[%s106 + $0x18] sm:$0xff]
    %v111 = vld [vmem:[%s106 + $0x20] sm:$0xff]
    %v112 = vld [vmem:[%s106 + $0x28] sm:$0xff]
    %v113 = vld [vmem:[%s106 + $0x30] sm:$0xff]
    %v114 = vld [vmem:[%s106 + $0x38] sm:$0xff]
    %v115 = vadd.f32 %v98, %v107
    %v116 = vadd.f32 %v99, %v108
    %v117 = vadd.f32 %v100, %v109
    %v118 = vadd.f32 %v101, %v110
    %v119 = vadd.f32 %v102, %v111
    %v120 = vadd.f32 %v103, %v112
    %v121 = vadd.f32 %v104, %v113
    %v122 = vadd.f32 %v105, %v114
    %s123 = scalar_lea.vmem [#allocation6], 320
    %v124 = vld [vmem:[%s123] sm:$0xff]
    %v125 = vld [vmem:[%s123 + $0x8] sm:$0xff]
    %v126 = vld [vmem:[%s123 + $0x10] sm:$0xff]
    %v127 = vld [vmem:[%s123 + $0x18] sm:$0xff]
    %v128 = vld [vmem:[%s123 + $0x20] sm:$0xff]
    %v129 = vld [vmem:[%s123 + $0x28] sm:$0xff]
    %v130 = vld [vmem:[%s123 + $0x30] sm:$0xff]
    %v131 = vld [vmem:[%s123 + $0x38] sm:$0xff]
    %v132 = vadd.f32 %v115, %v124
    %v133 = vadd.f32 %v116, %v125
    %v134 = vadd.f32 %v117, %v126
    %v135 = vadd.f32 %v118, %v127
    %v136 = vadd.f32 %v119, %v128
    %v137 = vadd.f32 %v120, %v129
    %v138 = vadd.f32 %v121, %v130
    %v139 = vadd.f32 %v122, %v131
    %s140 = sld [smem:[#allocation2 + $0x1]]
    %v141 = vstv %s140
    %v142 = vmul.f32 %v132, %v141
    %v143 = vmul.f32 %v133, %v141
    %v144 = vmul.f32 %v134, %v141
    %v145 = vmul.f32 %v135, %v141
    %v146 = vmul.f32 %v136, %v141
    %v147 = vmul.f32 %v137, %v141
    %v148 = vmul.f32 %v138, %v141
    %v149 = vmul.f32 %v139, %v141
    %s150 = scalar_lea.vmem [#allocation7], 64
    %151 = vst [vmem:[%s150] sm:$0xff] %v142
    %152 = vst [vmem:[%s150 + $0x8] sm:$0xff] %v143
    %153 = vst [vmem:[%s150 + $0x10] sm:$0xff] %v144
    %154 = vst [vmem:[%s150 + $0x18] sm:$0xff] %v145
    %155 = vst [vmem:[%s150 + $0x20] sm:$0xff] %v146
    %156 = vst [vmem:[%s150 + $0x28] sm:$0xff] %v147
    %157 = vst [vmem:[%s150 + $0x30] sm:$0xff] %v148
    %158 = vst [vmem:[%s150 + $0x38] sm:$0xff] %v149
    // Predicated region
    $region18: #{tpu_custom_call.1} parent=1 // pred_check
      _
    $region19: #{tpu_custom_call.1} parent=1 // pred_check_branch
      %160 = sbr.rel (0) target = $region21
    $region20: #{tpu_custom_call.1} parent=1 // pred_region
      %s162 = ssub.s32 2048, 2048
      %163 = vsyncadd [#allocation4], %s162
      %s164 = sshll.u32 [#allocation7], 4
      %s165 = int_to_ptr.vmem [resolvable:$true] %s164
      %170 = dma.vmem_to_hbm [thread:$0]  %s165, 2048, %s2, [#allocation4], 1024, 1024, 64
    $region21: #{tpu_custom_call.1} parent=1 // pred_fallthru
      _
    // Predicated region
    $region22: #{tpu_custom_call.1} parent=1 // pred_check
      _
    $region23: #{tpu_custom_call.1} parent=1 // pred_check_branch
      %172 = sbr.rel (0) target = $region25
    $region24: #{tpu_custom_call.1} parent=1 // pred_region
      %173 = dma.done [#allocation4], 2048
    $region25: #{tpu_custom_call.1} parent=1 // pred_fallthru
      _
    %174 = vsyncpa [#allocation3], 1
    %175 = vsyncpa [#allocation4], 1
    %176 = vsyncpa [#allocation5], 1

</llo_original>
